<compile_context>
chip_gen: v5e
topology: v5e:2x2
jax: 0.10.0
libtpu: 0.0.40
codegen_flags: <defaults>
</compile_context>

<pallas_src>
import jax
import jax.numpy as jnp
import numpy as np
from jax.experimental import pallas as pl
from jax.experimental.pallas import tpu as pltpu

ENCODER_SIZE = 32     # dmpnn encoder_size (small synthetic setting; PyTorch default 300)
EXTRA_DIM = 4         # extra_features_dim
SYS_DIM = 8           # sys_features_dim
HIDDEN_PV = (16, 2)   # hidden_units_pv
HIDDEN = (16, 8)      # hidden_units
BATCH = 8

# ---- lane-dense packed-slab layout (f32, width 128, all row offsets multiples of 8) ----
W_COLS = 128
PAD_IN = 64           # 44 real input features (enc 32 + extra 4 + sysf 8) padded to 64
OUT_COLS = 128        # lane-dense output block width

ROW_WA = 0                    # [64,128]: lanes 0:16 = Wpv1^T, lanes 16:32 = Wr1x^T
ROW_WR1PV = PAD_IN            # 64: [16,16] pv-rows of Wr1^T (lanes 0:16)
ROW_WPV2 = ROW_WR1PV + 16     # 80: [16,16] Wpv2^T (lanes 0:16, real cols 0:2)
ROW_WR2 = ROW_WPV2 + 16       # 96: [16,16] Wr2^T  (lanes 0:16, real cols 0:8)
ROW_TAIL = ROW_WR2 + 16       # 112: 8 rows: biases (bpv1,bpv2,br1,br2,bid), wid row
SLAB_ROWS = ROW_TAIL + 8      # 120


def _mpnranker_head_kernel(x_ref, w_ref, out_ref):
    """x_ref: (PB, 64)   w_ref: (120, 128)   out_ref: (PB, 128)."""
    f32 = jnp.float32
    x = x_ref[...]                                      # [PB, 64]
    tail = w_ref[ROW_TAIL:ROW_TAIL + 8, 0:16]           # [8, 16] biases + ident row

    # Fused first MXU pass: x @ [Wpv1^T | Wr1x^T | 0] -> [PB, 128]
    #   lanes  0:16 -> pre-activation of hidden_pv[0]
    #   lanes 16:32 -> enc/extra contribution of hidden[0] (res_conn_enc=True)
    r = jnp.dot(x, w_ref[ROW_WA:ROW_WA + PAD_IN, :], preferred_element_type=f32)

    # hidden_pv[0]
    pv = jnp.maximum(r[:, 0:16] + tail[0:1, :], 0.0)                      # [PB, 16]
    # hidden_pv[1]  (out dim 2 padded to 16; padded cols stay exactly 0 through ReLU)
    wpv2 = w_ref[ROW_WPV2:ROW_WPV2 + 16, 0:16]
    pv = jnp.maximum(jnp.dot(pv, wpv2, preferred_element_type=f32) + tail[1:2, :], 0.0)
    # dropout_pv: eval-mode identity (rate 0.0)

    # hidden[0] on cat([enc, extra, enc_pv], 1)
    #   = (enc/extra part from fused matmul) + pv @ Wr1pv^T + br1
    wr1pv = w_ref[ROW_WR1PV:ROW_WR1PV + 16, 0:16]
    h = r[:, 16:32] + jnp.dot(pv, wr1pv, preferred_element_type=f32) + tail[2:3, :]
    h = jnp.maximum(h, 0.0)                                               # [PB, 16]
    # hidden[1]
    wr2 = w_ref[ROW_WR2:ROW_WR2 + 16, 0:16]
    h = jnp.maximum(jnp.dot(h, wr2, preferred_element_type=f32) + tail[3:4, :], 0.0)
    # dropout_rank: eval-mode identity

    # ident layer (8 -> 1) as VPU multiply + lane reduce (no 5th/6th MXU matmul),
    # then sigmoid (no_sigmoid_roi=False).  tail row 5 holds the ident weights,
    # tail[4, 0] the ident bias.
    roi = jnp.sum(h * tail[5:6, :], axis=-1, keepdims=True) + tail[4:5, 0:1]  # [PB, 1]
    out_ref[...] = jnp.broadcast_to(jax.nn.sigmoid(roi), out_ref.shape)   # lane-dense store


def mpnranker_forward(batch, slab):
    """batch: (1|2) x (enc, extra, sysf) ; returns [sigmoid(roi)] per pair element."""
    if len(batch) > 2:
        raise Exception('only one or two molecules are supported for now, not ',
                        len(batch))
    P = len(batch)
    B = batch[0][0].shape[0]

    xs = []
    for (enc, extra, sysf) in batch:
        x = jnp.concatenate([enc, extra, sysf], axis=1)            # [B, 44]
        x = jnp.pad(x.astype(jnp.float32), ((0, 0), (0, PAD_IN - x.shape[1])))
        xs.append(x)
    x_all = jnp.concatenate(xs, axis=0)                            # [P*B, 64]
    PB = P * B

    out = pl.pallas_call(
        _mpnranker_head_kernel,
        out_shape=jax.ShapeDtypeStruct((PB, OUT_COLS), jnp.float32),
        in_specs=[
            pl.BlockSpec(memory_space=pltpu.MemorySpace.VMEM),     # activations (whole)
            pl.BlockSpec(memory_space=pltpu.MemorySpace.VMEM),     # weight slab (whole)
        ],
        out_specs=pl.BlockSpec(memory_space=pltpu.MemorySpace.VMEM),
    )(x_all, slab)

    # == roi.transpose(0, 1)[0] per pair element
    return [out[p * B:(p + 1) * B, 0] for p in range(P)]


# ------------------------- parameter initialization -------------------------

def _init_linear(key, in_dim, out_dim):
    # matches torch.nn.Linear default: U(-1/sqrt(in), 1/sqrt(in)) for W and b
    kw, kb = jax.random.split(key)
    bound = 1.0 / float(np.sqrt(in_dim))
    w = jax.random.uniform(kw, (out_dim, in_dim), jnp.float32, -bound, bound)
    b = jax.random.uniform(kb, (out_dim,), jnp.float32, -bound, bound)
    return w, b


def init_raw_params(key):
    encextra = ENCODER_SIZE + EXTRA_DIM + SYS_DIM                 # encextra_size
    last_dim = ENCODER_SIZE + EXTRA_DIM + HIDDEN_PV[-1]           # res_conn_enc=True
    keys = jax.random.split(key, 5)
    wpv1, bpv1 = _init_linear(keys[0], encextra, HIDDEN_PV[0])    # hidden_pv[0]
    wpv2, bpv2 = _init_linear(keys[1], HIDDEN_PV[0], HIDDEN_PV[1])  # hidden_pv[1]
    wr1, br1 = _init_linear(keys[2], last_dim, HIDDEN[0])         # hidden[0]
    wr2, br2 = _init_linear(keys[3], HIDDEN[0], HIDDEN[1])        # hidden[1]
    wid, bid = _init_linear(keys[4], HIDDEN[1], 1)                # ident
    return dict(wpv1=wpv1, bpv1=bpv1, wpv2=wpv2, bpv2=bpv2,
                wr1=wr1, br1=br1, wr2=wr2, br2=br2, wid=wid, bid=bid)


def pack_params(p):
    """Pack all weights/biases into one lane-dense f32 slab [SLAB_ROWS, 128].

    Padded rows/cols are exactly zero, so zero-padding survives bias-add + ReLU and
    never contaminates the fused matmuls (valid because dropout rates are 0.0).
    """
    wpv1_t = p['wpv1'].T                                   # [44, 16]
    wr1_t = p['wr1'].T                                     # [38, 16]
    wr1x_t = wr1_t[:ENCODER_SIZE + EXTRA_DIM]              # [36, 16] (enc+extra rows)
    wr1pv_t = wr1_t[ENCODER_SIZE + EXTRA_DIM:]             # [ 2, 16] (pv rows)

    slab = jnp.zeros((SLAB_ROWS, W_COLS), jnp.float32)
    slab = slab.at[0:wpv1_t.shape[0], 0:16].set(wpv1_t)            # WA lanes 0:16
    slab = slab.at[0:wr1x_t.shape[0], 16:32].set(wr1x_t)           # WA lanes 16:32
    slab = slab.at[ROW_WR1PV:ROW_WR1PV + 2, 0:16].set(wr1pv_t)     # Wr1pv^T
    slab = slab.at[ROW_WPV2:ROW_WPV2 + 16, 0:2].set(p['wpv2'].T)   # Wpv2^T
    slab = slab.at[ROW_WR2:ROW_WR2 + 16, 0:8].set(p['wr2'].T)      # Wr2^T
    slab = slab.at[ROW_TAIL + 0, 0:16].set(p['bpv1'])
    slab = slab.at[ROW_TAIL + 1, 0:2].set(p['bpv2'])
    slab = slab.at[ROW_TAIL + 2, 0:16].set(p['br1'])
    slab = slab.at[ROW_TAIL + 3, 0:8].set(p['br2'])
    slab = slab.at[ROW_TAIL + 4, 0:1].set(p['bid'])
    slab = slab.at[ROW_TAIL + 5, 0:8].set(p['wid'][0])             # ident weights as a row
    assert slab.shape == (SLAB_ROWS, W_COLS)
    return slab


# ------------------------------ pure-JAX reference --------------------------

def _reference(enc, extra, sysf, p):
    pv = jnp.concatenate([enc, extra, sysf], axis=1)
    pv = jax.nn.relu(pv @ p['wpv1'].T + p['bpv1'])
    pv = jax.nn.relu(pv @ p['wpv2'].T + p['bpv2'])
    h = jnp.concatenate([enc, extra, pv], axis=1)
    h = jax.nn.relu(h @ p['wr1'].T + p['br1'])
    h = jax.nn.relu(h @ p['wr2'].T + p['br2'])
    roi = h @ p['wid'].T + p['bid']
    return jax.nn.sigmoid(roi)[:, 0]


if __name__ == "__main__":
    root = jax.random.PRNGKey(0)
    kp, k1, k2, k3, k4, k5, k6 = jax.random.split(root, 7)
    raw = init_raw_params(kp)
    slab = pack_params(raw)

    # two pair elements (ranking pair), each: (encoder output, extra feats, sys feats)
    enc1 = jax.random.normal(k1, (BATCH, ENCODER_SIZE), jnp.float32)
    extra1 = jax.random.normal(k2, (BATCH, EXTRA_DIM), jnp.float32)
    sysf1 = jax.random.normal(k3, (BATCH, SYS_DIM), jnp.float32)
    enc2 = jax.random.normal(k4, (BATCH, ENCODER_SIZE), jnp.float32)
    extra2 = jax.random.normal(k5, (BATCH, EXTRA_DIM), jnp.float32)
    sysf2 = jax.random.normal(k6, (BATCH, SYS_DIM), jnp.float32)

    batch = ((enc1, extra1, sysf1), (enc2, extra2, sysf2))
    out = mpnranker_forward(batch, slab)
    out = [jax.block_until_ready(o) for o in out]

    ref = [_reference(e, x, s, raw) for (e, x, s) in batch]
    for o, r in zip(out, ref):
        np.testing.assert_allclose(np.asarray(o), np.asarray(r), rtol=1e-5, atol=1e-6)
        assert o.shape == (BATCH,)

    print("KERNEL_OK")
</pallas_src>

<mosaic_0001>
module attributes {stable_mosaic.version = 11 : i64} {
  func.func @_mpnranker_head_kernel(%arg0: memref<16x64xf32, #tpu.memory_space<vmem>>, %arg1: memref<120x128xf32, #tpu.memory_space<vmem>>, %arg2: memref<16x128xf32, #tpu.memory_space<vmem>>) attributes {dimension_semantics = [], scalar_prefetch = 0 : i64, scratch_operands = 0 : i64, tpu.core_type = #tpu.core_type<tc>} {
    %c0 = arith.constant 0 : index
    %c0_0 = arith.constant 0 : index
    %0 = vector.load %arg0[%c0, %c0_0] : memref<16x64xf32, #tpu.memory_space<vmem>>, vector<16x64xf32>
    %c112 = arith.constant 112 : index
    %c0_1 = arith.constant 0 : index
    %1 = vector.load %arg1[%c112, %c0_1] : memref<120x128xf32, #tpu.memory_space<vmem>>, vector<8x16xf32>
    %c0_2 = arith.constant 0 : index
    %c0_3 = arith.constant 0 : index
    %2 = vector.load %arg1[%c0_2, %c0_3] : memref<120x128xf32, #tpu.memory_space<vmem>>, vector<64x128xf32>
    %cst = arith.constant dense<0.000000e+00> : vector<16x128xf32>
    %3 = tpu.matmul %0, %2, %cst {dimension_numbers = #tpu.dot_dimension_numbers<[1], [0], [0], [1], [0, 0, 1, 1], [], []>} : vector<16x64xf32>, vector<64x128xf32>, vector<16x128xf32> -> vector<16x128xf32>
    %4 = vector.extract_strided_slice %3 {offsets = [0, 0], sizes = [16, 16], strides = [1, 1]} : vector<16x128xf32> to vector<16x16xf32>
    %5 = vector.extract_strided_slice %1 {offsets = [0, 0], sizes = [1, 16], strides = [1, 1]} : vector<8x16xf32> to vector<1x16xf32>
    %6 = vector.broadcast %5 : vector<1x16xf32> to vector<16x16xf32>
    %7 = arith.addf %4, %6 : vector<16x16xf32>
    %cst_4 = arith.constant 0.000000e+00 : f32
    %8 = vector.broadcast %cst_4 : f32 to vector<16x16xf32>
    %9 = arith.maximumf %7, %8 : vector<16x16xf32>
    %c80 = arith.constant 80 : index
    %c0_5 = arith.constant 0 : index
    %10 = vector.load %arg1[%c80, %c0_5] : memref<120x128xf32, #tpu.memory_space<vmem>>, vector<16x16xf32>
    %cst_6 = arith.constant dense<0.000000e+00> : vector<16x16xf32>
    %11 = tpu.matmul %9, %10, %cst_6 {dimension_numbers = #tpu.dot_dimension_numbers<[1], [0], [0], [1], [0, 0, 1, 1], [], []>} : vector<16x16xf32>, vector<16x16xf32>, vector<16x16xf32> -> vector<16x16xf32>
    %12 = vector.extract_strided_slice %1 {offsets = [1, 0], sizes = [1, 16], strides = [1, 1]} : vector<8x16xf32> to vector<1x16xf32>
    %13 = vector.broadcast %12 : vector<1x16xf32> to vector<16x16xf32>
    %14 = arith.addf %11, %13 : vector<16x16xf32>
    %cst_7 = arith.constant 0.000000e+00 : f32
    %15 = vector.broadcast %cst_7 : f32 to vector<16x16xf32>
    %16 = arith.maximumf %14, %15 : vector<16x16xf32>
    %c64 = arith.constant 64 : index
    %c0_8 = arith.constant 0 : index
    %17 = vector.load %arg1[%c64, %c0_8] : memref<120x128xf32, #tpu.memory_space<vmem>>, vector<16x16xf32>
    %18 = vector.extract_strided_slice %3 {offsets = [0, 16], sizes = [16, 16], strides = [1, 1]} : vector<16x128xf32> to vector<16x16xf32>
    %cst_9 = arith.constant dense<0.000000e+00> : vector<16x16xf32>
    %19 = tpu.matmul %16, %17, %cst_9 {dimension_numbers = #tpu.dot_dimension_numbers<[1], [0], [0], [1], [0, 0, 1, 1], [], []>} : vector<16x16xf32>, vector<16x16xf32>, vector<16x16xf32> -> vector<16x16xf32>
    %20 = arith.addf %18, %19 : vector<16x16xf32>
    %21 = vector.extract_strided_slice %1 {offsets = [2, 0], sizes = [1, 16], strides = [1, 1]} : vector<8x16xf32> to vector<1x16xf32>
    %22 = vector.broadcast %21 : vector<1x16xf32> to vector<16x16xf32>
    %23 = arith.addf %20, %22 : vector<16x16xf32>
    %cst_10 = arith.constant 0.000000e+00 : f32
    %24 = vector.broadcast %cst_10 : f32 to vector<16x16xf32>
    %25 = arith.maximumf %23, %24 : vector<16x16xf32>
    %c96 = arith.constant 96 : index
    %c0_11 = arith.constant 0 : index
    %26 = vector.load %arg1[%c96, %c0_11] : memref<120x128xf32, #tpu.memory_space<vmem>>, vector<16x16xf32>
    %cst_12 = arith.constant dense<0.000000e+00> : vector<16x16xf32>
    %27 = tpu.matmul %25, %26, %cst_12 {dimension_numbers = #tpu.dot_dimension_numbers<[1], [0], [0], [1], [0, 0, 1, 1], [], []>} : vector<16x16xf32>, vector<16x16xf32>, vector<16x16xf32> -> vector<16x16xf32>
    %28 = vector.extract_strided_slice %1 {offsets = [3, 0], sizes = [1, 16], strides = [1, 1]} : vector<8x16xf32> to vector<1x16xf32>
    %29 = vector.broadcast %28 : vector<1x16xf32> to vector<16x16xf32>
    %30 = arith.addf %27, %29 : vector<16x16xf32>
    %cst_13 = arith.constant 0.000000e+00 : f32
    %31 = vector.broadcast %cst_13 : f32 to vector<16x16xf32>
    %32 = arith.maximumf %30, %31 : vector<16x16xf32>
    %33 = vector.extract_strided_slice %1 {offsets = [5, 0], sizes = [1, 16], strides = [1, 1]} : vector<8x16xf32> to vector<1x16xf32>
    %34 = vector.broadcast %33 : vector<1x16xf32> to vector<16x16xf32>
    %35 = arith.mulf %32, %34 : vector<16x16xf32>
    %cst_14 = arith.constant dense<0.000000e+00> : vector<16xf32>
    %36 = vector.multi_reduction <add>, %35, %cst_14 [1] : vector<16x16xf32> to vector<16xf32>
    %37 = vector.shape_cast %36 : vector<16xf32> to vector<16x1xf32>
    %38 = vector.extract_strided_slice %1 {offsets = [4, 0], sizes = [1, 1], strides = [1, 1]} : vector<8x16xf32> to vector<1x1xf32>
    %39 = vector.broadcast %38 : vector<1x1xf32> to vector<16x1xf32>
    %40 = arith.addf %37, %39 : vector<16x1xf32>
    %41 = arith.negf %40 : vector<16x1xf32>
    %42 = math.exp %41 : vector<16x1xf32>
    %cst_15 = arith.constant 1.000000e+00 : f32
    %43 = vector.broadcast %cst_15 : f32 to vector<16x1xf32>
    %44 = arith.addf %43, %42 : vector<16x1xf32>
    %45 = arith.divf %43, %44 : vector<16x1xf32>
    %46 = vector.shape_cast %45 : vector<16x1xf32> to vector<16x1xf32>
    %47 = vector.broadcast %46 : vector<16x1xf32> to vector<16x128xf32>
    %c0_16 = arith.constant 0 : index
    %c0_17 = arith.constant 0 : index
    %48 = vector.load %arg2[%c0_16, %c0_17] : memref<16x128xf32, #tpu.memory_space<vmem>>, vector<16x128xf32>
    tpu.vector_store %arg2[%c0_16, %c0_17], %47 {strides = array<i32>} : memref<16x128xf32, #tpu.memory_space<vmem>>, vector<16x128xf32>,
    return
  }
}

</mosaic_0001>

<llo_original>
// kernel: tpu_custom_call.1
$region0: #{tpu_custom_call.1}
  #allocation0 [shape = 'u32[]', space=smem, size = 0x4, offset = 0x4, fixed_abs, tag = 'smem constant byte address 0x4 - core index']
  #allocation1 [shape = 'u32[72,128]{1,0:T(1,128)}', space=vmem, size = 0x9000, scoped, tag = 'internal scratch']
  %s0 = inlined_call_operand.hbm [shape: f32[16,64], index: 0, kind: input, shape index: {}]
  %s1 = inlined_call_operand.hbm [shape: f32[120,128], index: 1, kind: input, shape index: {}]
  %s2 = inlined_call_operand.hbm [shape: f32[16,128], index: 2, kind: output, shape index: {}]
  %s3 = sld [smem:[#allocation0]]
  $region26: #{tpu_custom_call.1} parent=0
    _
  %s5 = ssub.s32 1, %s3
  %s6 = scalar_select 0, %s5, %s3
  $region1: #{tpu_custom_call.1} parent=0
    #allocation2 [shape = 'u8[8192]{0}', space=vmem, size = 0x2000, scoped, tag = 'input window, operand 0, single buffered']
    #allocation3 [shape = 's32[1]{0}', space=sflag, size = 0x4, scoped, tag = 'scoped memory for tpu_custom_call.1']
    #allocation4 [shape = 's32[1]{0}', space=sflag, size = 0x4, scoped, tag = 'scoped memory for tpu_custom_call.1']
    #allocation5 [shape = 'u8[61440]{0}', space=vmem, size = 0xf000, scoped, tag = 'input window, operand 1, single buffered']
    #allocation6 [shape = 's32[1]{0}', space=sflag, size = 0x4, scoped, tag = 'scoped memory for tpu_custom_call.1']
    #allocation7 [shape = 'u8[8192]{0}', space=vmem, size = 0x2000, scoped, tag = 'output window, operand 0, single buffered']
    %7 = vsyncpa [#allocation3], 0
    %8 = vsyncpa [#allocation6], 0
    %9 = vsyncpa [#allocation4], 0
    // Predicated region
    $region2: #{tpu_custom_call.1} parent=1 // pred_check
      _
    $region3: #{tpu_custom_call.1} parent=1 // pred_check_branch
      %11 = sbr.rel (0) target = $region5
    $region4: #{tpu_custom_call.1} parent=1 // pred_region
      %13 = vsyncadd [#allocation3], 0
      %s14 = sshll.u32 %s0, 4
      %s15 = int_to_ptr.hbm [resolvable:$true] %s14
      %s16 = sshll.u32 [#allocation2], 4
      %s17 = int_to_ptr.vmem [resolvable:$true] %s16
      %22 = dma.hbm_to_vmem [thread:$0]  %s15, 256, %s17, [#allocation3], 128, 128, 8
    $region5: #{tpu_custom_call.1} parent=1 // pred_fallthru
      _
    // Predicated region
    $region6: #{tpu_custom_call.1} parent=1 // pred_check
      _
    $region7: #{tpu_custom_call.1} parent=1 // pred_check_branch
      %24 = sbr.rel (0) target = $region9
    $region8: #{tpu_custom_call.1} parent=1 // pred_region
      %26 = vsyncadd [#allocation6], 0
      %s27 = sshll.u32 %s1, 4
      %s28 = int_to_ptr.hbm [resolvable:$true] %s27
      %s29 = sshll.u32 [#allocation5], 4
      %s30 = int_to_ptr.vmem [resolvable:$true] %s29
      %35 = dma.hbm_to_vmem [thread:$0]  %s28, 1920, %s30, [#allocation6], 128, 128, 8
    $region9: #{tpu_custom_call.1} parent=1 // pred_fallthru
      _
    // Predicated region
    $region10: #{tpu_custom_call.1} parent=1 // pred_check
      _
    $region11: #{tpu_custom_call.1} parent=1 // pred_check_branch
      %37 = sbr.rel (0) target = $region13
    $region12: #{tpu_custom_call.1} parent=1 // pred_region
      %39 = dma.done [#allocation3], 256
    $region13: #{tpu_custom_call.1} parent=1 // pred_fallthru
      _
    // Predicated region
    $region14: #{tpu_custom_call.1} parent=1 // pred_check
      _
    $region15: #{tpu_custom_call.1} parent=1 // pred_check_branch
      %41 = sbr.rel (0) target = $region17
    $region16: #{tpu_custom_call.1} parent=1 // pred_region
      %43 = dma.done [#allocation6], 1920
    $region17: #{tpu_custom_call.1} parent=1 // pred_fallthru
      _
    %v44 = vld [vmem:[#allocation2] sm:$0xff]
    %v45 = vld [vmem:[#allocation2 + $0x8] sm:$0xff]
    %v46 = vld [vmem:[#allocation5 + $0x70] sm:$0xff]
    %v47 = vld [vmem:[#allocation5] sm:$0xff]
    %v48 = vld [vmem:[#allocation5 + $0x8] sm:$0xff]
    %v49 = vld [vmem:[#allocation5 + $0x10] sm:$0xff]
    %v50 = vld [vmem:[#allocation5 + $0x18] sm:$0xff]
    %v51 = vld [vmem:[#allocation5 + $0x20] sm:$0xff]
    %v52 = vld [vmem:[#allocation5 + $0x28] sm:$0xff]
    %v53 = vld [vmem:[#allocation5 + $0x30] sm:$0xff]
    %v54 = vld [vmem:[#allocation5 + $0x38] sm:$0xff]
    %vm55 = vcmask 523264
    %v57 = vsel %vm55, %v44, 0
    %v60 = vsel %vm55, %v45, 0
    %62 = vmatpush.msra.mxu0 0.0
    %63 = vmatpush.msra.mxu0 0.0
    %64 = vmatpush.msra.mxu0 0.0
    %65 = vmatpush.msra.mxu0 0.0
    %66 = vmatpush.msra.mxu0 0.0
    %67 = vmatpush.msra.mxu0 0.0
    %68 = vmatpush.msra.mxu0 0.0
    %69 = vmatpush.msra.mxu0 0.0
    %70 = vmatpush.msra.mxu0 %v54
    %71 = vmatpush.msra.mxu0 %v53
    %72 = vmatpush.msra.mxu0 %v52
    %73 = vmatpush.msra.mxu0 %v51
    %74 = vmatpush.msra.mxu0 %v50
    %75 = vmatpush.msra.mxu0 %v49
    %76 = vmatpush.msra.mxu0 %v48
    %77 = vmatpush.msra.mxu0 %v47
    %78 = vmatmul.f32.gmra.mxu0 %v57
    %v79 = vpop.f32.mrf.mxu0
    %v80 = vadd.f32 0.0, %v79
    %81 = vmatmul.f32.gmra.mxu0 %v60
    %v82 = vpop.f32.mrf.mxu0
    %v83 = vadd.f32 0.0, %v82
    %84 = vdwg.mxu0
    %v85 = vperm.slane %v46, 0
    %v86 = vadd.f32 %v80, %v85
    %v87 = vadd.f32 %v83, %v85
    %v88 = vmax.f32 %v86, 0.0
    %v89 = vmax.f32 %v87, 0.0
    %v90 = vld [vmem:[#allocation5 + $0x50] sm:$0xff]
    %v91 = vld [vmem:[#allocation5 + $0x58] sm:$0xff]
    %v92 = vperm.slane %v46, 1
    %vm93 = vcmask 130048
    %v95 = vsel %vm93, %v88, 0
    %v98 = vsel %vm93, %v89, 0
    %100 = vmatpush.msra.mxu0 0.0
    %101 = vmatpush.msra.mxu0 0.0
    %102 = vmatpush.msra.mxu0 0.0
    %103 = vmatpush.msra.mxu0 0.0
    %104 = vmatpush.msra.mxu0 0.0
    %105 = vmatpush.msra.mxu0 0.0
    %106 = vmatpush.msra.mxu0 0.0
    %107 = vmatpush.msra.mxu0 0.0
    %108 = vmatpush.msra.mxu0 0.0
    %109 = vmatpush.msra.mxu0 0.0
    %110 = vmatpush.msra.mxu0 0.0
    %111 = vmatpush.msra.mxu0 0.0
    %112 = vmatpush.msra.mxu0 0.0
    %113 = vmatpush.msra.mxu0 0.0
    %114 = vmatpush.msra.mxu0 %v91
    %115 = vmatpush.msra.mxu0 %v90
    %116 = vmatmul.f32.gmra.mxu0 %v95
    %v117 = vpop.f32.mrf.mxu0
    %v118 = vadd.f32 %v92, %v117
    %119 = vmatmul.f32.gmra.mxu0 %v98
    %v120 = vpop.f32.mrf.mxu0
    %v121 = vadd.f32 %v92, %v120
    %122 = vdwg.mxu0
    %v123 = vmax.f32 %v118, 0.0
    %v124 = vmax.f32 %v121, 0.0
    %v125 = vld [vmem:[#allocation5 + $0x40] sm:$0xff]
    %v126 = vld [vmem:[#allocation5 + $0x48] sm:$0xff]
    %v128 = vsel %vm93, %v123, 0
    %v131 = vsel %vm93, %v124, 0
    %133 = vmatpush.msra.mxu0 0.0
    %134 = vmatpush.msra.mxu0 0.0
    %135 = vmatpush.msra.mxu0 0.0
    %136 = vmatpush.msra.mxu0 0.0
    %137 = vmatpush.msra.mxu0 0.0
    %138 = vmatpush.msra.mxu0 0.0
    %139 = vmatpush.msra.mxu0 0.0
    %140 = vmatpush.msra.mxu0 0.0
    %141 = vmatpush.msra.mxu0 0.0
    %142 = vmatpush.msra.mxu0 0.0
    %143 = vmatpush.msra.mxu0 0.0
    %144 = vmatpush.msra.mxu0 0.0
    %145 = vmatpush.msra.mxu0 0.0
    %146 = vmatpush.msra.mxu0 0.0
    %147 = vmatpush.msra.mxu0 %v126
    %148 = vmatpush.msra.mxu0 %v125
    %149 = vmatmul.f32.gmra.mxu0 %v128
    %v150 = vpop.f32.mrf.mxu0
    %v151 = vadd.f32 0.0, %v150
    %152 = vmatmul.f32.gmra.mxu0 %v131
    %v153 = vpop.f32.mrf.mxu0
    %v154 = vadd.f32 0.0, %v153
    %155 = vdwg.mxu0
    %158 = vrot.lane.b32.xlu0 %v151, 16
    %v159 = vpop.permute.xlu0 %158
    %160 = vrot.lane.b32.xlu0 %v154, 16
    %v161 = vpop.permute.xlu0 %160
    %v164 = vadd.f32 %v80, %v159
    %v165 = vadd.f32 %v83, %v161
    %v166 = vperm.slane %v46, 2
    %168 = vrot.lane.b32.xlu0 %v166, 16
    %v169 = vpop.permute.xlu0 %168
    %v171 = vadd.f32 %v164, %v169
    %v172 = vadd.f32 %v165, %v169
    %v173 = vmax.f32 %v171, 0.0
    %v174 = vmax.f32 %v172, 0.0
    %v175 = vld [vmem:[#allocation5 + $0x60] sm:$0xff]
    %v176 = vld [vmem:[#allocation5 + $0x68] sm:$0xff]
    %v177 = vperm.slane %v46, 3
    %180 = vrot.lane.b32.xlu0 %v173, 112
    %v181 = vpop.permute.xlu0 %180
    %182 = vrot.lane.b32.xlu0 %v174, 112
    %v183 = vpop.permute.xlu0 %182
    %v184 = vsel %vm93, %v181, 0
    %v186 = vsel %vm93, %v183, 0
    %188 = vmatpush.msra.mxu0 0.0
    %189 = vmatpush.msra.mxu0 0.0
    %190 = vmatpush.msra.mxu0 0.0
    %191 = vmatpush.msra.mxu0 0.0
    %192 = vmatpush.msra.mxu0 0.0
    %193 = vmatpush.msra.mxu0 0.0
    %194 = vmatpush.msra.mxu0 0.0
    %195 = vmatpush.msra.mxu0 0.0
    %196 = vmatpush.msra.mxu0 0.0
    %197 = vmatpush.msra.mxu0 0.0
    %198 = vmatpush.msra.mxu0 0.0
    %199 = vmatpush.msra.mxu0 0.0
    %200 = vmatpush.msra.mxu0 0.0
    %201 = vmatpush.msra.mxu0 0.0
    %202 = vmatpush.msra.mxu0 %v176
    %203 = vmatpush.msra.mxu0 %v175
    %204 = vmatmul.f32.gmra.mxu0 %v184
    %v205 = vpop.f32.mrf.mxu0
    %v206 = vadd.f32 %v177, %v205
    %207 = vmatmul.f32.gmra.mxu0 %v186
    %v208 = vpop.f32.mrf.mxu0
    %v209 = vadd.f32 %v177, %v208
    %210 = vdwg.mxu0
    %v211 = vmax.f32 %v206, 0.0
    %v212 = vmax.f32 %v209, 0.0
    %v213 = vperm.slane %v46, 5
    %v214 = vmul.f32 %v211, %v213
    %v215 = vmul.f32 %v212, %v213
    %v216 = vsel %vm93, %v214, 0.0
    %217 = vadd.xlane.f32.xlu0 %v216
    %v218 = vpop.xlane.xlu0 %217
    %v219 = vsel %vm93, %v215, 0.0
    %220 = vadd.xlane.f32.xlu0 %v219
    %v221 = vpop.xlane.xlu0 %220
    %v222 = vperm.slane %v46, 4
    %v223 = vadd.f32 %v218, %v222
    %v224 = vadd.f32 %v221, %v222
    %v225 = vxor.u32 %v223, 2147483648
    %v226 = vxor.u32 %v224, 2147483648
    %v227 = vmul.f32 %v225, 1.442695
    %v228 = vpow.pop %v227
    %v229 = vmul.f32 %v226, 1.442695
    %v230 = vpow.pop %v229
    %v231 = vadd.f32 %v228, 1.0
    %v232 = vadd.f32 %v230, 1.0
    %v233 = vrcp.pop %v231
    %v234 = vmul.f32 %v231, %v233
    %v235 = vsub.f32 1.0, %v234
    %v236 = vmul.f32 %v233, %v235
    %v237 = vadd.f32 %v233, %v236
    %vm238 = vweird.f32 %v231
    %vm239 = vweird.f32 %v233
    %vm240 = vmor %vm238, %vm239
    %v241 = vsel %vm240, %v233, %v237
    %v242 = vand.u32 2147483647, %v231
    %vm243 = vcmp.eq.f32.partialorder %v242, 8.507059e+37
    %v244 = vand.u32 %v231, 2147483648
    %v245 = vor.u32 1.1754944e-38, %v244
    %v246 = vsel %vm243, %v245, %v241
    %v247 = vmul.f32 1.0, %v246
    %v248 = vrcp.pop %v232
    %v249 = vmul.f32 %v232, %v248
    %v250 = vsub.f32 1.0, %v249
    %v251 = vmul.f32 %v248, %v250
    %v252 = vadd.f32 %v248, %v251
    %vm253 = vweird.f32 %v232
    %vm254 = vweird.f32 %v248
    %vm255 = vmor %vm253, %vm254
    %v256 = vsel %vm255, %v248, %v252
    %v257 = vand.u32 2147483647, %v232
    %vm258 = vcmp.eq.f32.partialorder %v257, 8.507059e+37
    %v259 = vand.u32 %v232, 2147483648
    %v260 = vor.u32 1.1754944e-38, %v259
    %v261 = vsel %vm258, %v260, %v256
    %v262 = vmul.f32 1.0, %v261
    %264 = vset.pattern.permute.xlu0 0
    %265 = vperm.xlu0 %264, %v247
    %v266 = vpop.permute.xlu0 %265
    %269 = vset.pattern.permute.xlu0 0
    %270 = vperm.xlu0 %269, %v262
    %v271 = vpop.permute.xlu0 %270
    %273 = vst [vmem:[#allocation7] sm:$0xff] %v266
    %274 = vst [vmem:[#allocation7 + $0x8] sm:$0xff] %v271
    // Predicated region
    $region18: #{tpu_custom_call.1} parent=1 // pred_check
      _
    $region19: #{tpu_custom_call.1} parent=1 // pred_check_branch
      %276 = sbr.rel (0) target = $region21
    $region20: #{tpu_custom_call.1} parent=1 // pred_region
      %278 = vsyncadd [#allocation4], 0
      %s279 = sshll.u32 [#allocation7], 4
      %s280 = int_to_ptr.vmem [resolvable:$true] %s279
      %s281 = sshll.u32 %s2, 4
      %s282 = int_to_ptr.hbm [resolvable:$true] %s281
      %287 = dma.vmem_to_hbm [thread:$0]  %s280, 256, %s282, [#allocation4], 128, 128, 8
    $region21: #{tpu_custom_call.1} parent=1 // pred_fallthru
      _
    // Predicated region
    $region22: #{tpu_custom_call.1} parent=1 // pred_check
      _
    $region23: #{tpu_custom_call.1} parent=1 // pred_check_branch
      %289 = sbr.rel (0) target = $region25
    $region24: #{tpu_custom_call.1} parent=1 // pred_region
      %291 = dma.done [#allocation4], 256
    $region25: #{tpu_custom_call.1} parent=1 // pred_fallthru
      _
    %292 = vsyncpa [#allocation3], 1
    %293 = vsyncpa [#allocation6], 1
    %294 = vsyncpa [#allocation4], 1

</llo_original>
